<compile_context>
chip_gen: v5e
topology: v5e:2x2
jax: 0.10.0
libtpu: 0.0.40
codegen_flags: <defaults>
</compile_context>

<pallas_src>
import functools
import math

import jax
import jax.numpy as jnp
from jax.experimental import pallas as pl
from jax.experimental.pallas import tpu as pltpu


def _round_up(x, m):
    return (x + m - 1) // m * m


def _vmem_capacity_bytes():
    try:
        return int(pltpu.get_tpu_info().vmem_capacity_bytes)
    except Exception:
        return 64 * 1024 * 1024          # conservative fallback (v7x-sized VMEM)


def _supports_bf16_eup():
    """bf16 VPU/EUP exists on v6e and newer; not on v5e/v4/..."""
    try:
        kind = jax.devices()[0].device_kind.lower()
    except Exception:
        return False
    return not any(v in kind for v in ("v2", "v3", "v4", "v5"))


def _plan_tiles(n_rows, S, C, itemsize, max_tile_rows=None):
    """Pick the row-tile size, #row-splits (TC parallelism) and vmem limit."""
    cap = _vmem_capacity_bytes()
    if cap >= 96 * 1024 * 1024:          # v5e / v6e: 128 MiB physical VMEM
        work_budget = 56 * 1024 * 1024
        vmem_limit = 100 * 1024 * 1024
    else:                                # v7x (64 MiB VMEM) or unknown: stay conservative
        work_budget = 24 * 1024 * 1024
        vmem_limit = 44 * 1024 * 1024
    # Bytes per tile row: 2x double-buffered inputs (logits + lane-padded int32 target
    # column) + ~4 live f32 [TR, C] intermediates + resident one-hot buffers.
    per_row = 2 * (C * itemsize + 512) + 16 * C + 64
    granule = math.lcm(8, S)             # sublane alignment AND dataset alignment
    tr = max(min(int(work_budget // per_row), 32768), 1)
    if max_tile_rows is not None:
        tr = min(tr, max_tile_rows)
    if tr >= n_rows:
        return n_rows, 1, 1, vmem_limit  # one tile covers everything
    tr = max((tr // granule) * granule, granule)
    num_tiles = -(-n_rows // tr)
    num_splits = 2 if num_tiles >= 2 else 1       # 2 TCs on v7x; sequential elsewhere
    tiles_per_split = -(-num_tiles // num_splits)
    return tr, num_splits, tiles_per_split, vmem_limit


def _loss_kernel(logits_ref, tgt_ref, onehot_ref, out_ref, acc_ref, *,
                 use_lse, bf16_exp, total_rows, tile_rows, tiles_per_split,
                 need_mask):
    """One row tile.

    logits_ref : VMEM [TR, C]      native dtype (cast to f32 in-kernel)
    tgt_ref    : VMEM [TR, 1]      int32 class indices
    onehot_ref : VMEM [S_pad, TR]  resident dataset one-hot (row r -> dataset r % S)
    out_ref    : VMEM [1, S_pad, 1] per-split per-dataset loss sums
    acc_ref    : VMEM [S_pad, 1]   f32 running sums across row tiles of this split
    """
    p = pl.program_id(0)     # row-range split ("parallel": maps to the 2 TCs on v7x)
    i = pl.program_id(1)     # row tile within the split ("arbitrary" reduction axis)

    @pl.when(i == 0)
    def _init():
        acc_ref[...] = jnp.zeros_like(acc_ref)

    x = logits_ref[...].astype(jnp.float32)                    # [TR, C]
    tr, c = x.shape
    tgt = tgt_ref[...]                                          # [TR, 1] int32

    # numerically stable shift
    m = jnp.max(x, axis=-1, keepdims=True)                      # [TR, 1]
    xm = x - m                                                  # [TR, C]; x dies here

    # target select built in-register (no one-hot DMA over classes)
    cls = jax.lax.broadcasted_iota(jnp.int32, (tr, c), 1)
    sel = cls == tgt                                            # [TR, C]

    if bf16_exp:
        e = jnp.exp(xm.astype(jnp.bfloat16)).astype(jnp.float32)
    else:
        e = jnp.exp(xm)
    denom = jnp.sum(e, axis=-1, keepdims=True)                  # [TR, 1] f32

    if use_lse:
        # sum((softmax - onehot)^2) == sum(e^2)*inv^2 - 2*e[tgt]*inv + 1
        inv = pl.reciprocal(denom, approx=False)                # per-row, cheap
        e_tgt = jnp.sum(jnp.where(sel, e, 0.0), axis=-1, keepdims=True)
        e_sq = jnp.sum(e * e, axis=-1, keepdims=True)
        per_ex = e_sq * inv * inv - 2.0 * e_tgt * inv + 1.0     # [TR, 1]
    else:
        # cross entropy: log(sum exp(x - m)) - (x[tgt] - m)
        xm_tgt = jnp.sum(jnp.where(sel, xm, 0.0), axis=-1, keepdims=True)
        per_ex = jnp.log(denom) - xm_tgt                        # [TR, 1]

    if need_mask:
        # rows past N are garbage (possibly NaN/Inf) -> zero them with a SELECT
        tile_start = (p * tiles_per_split + i) * tile_rows
        row = jax.lax.broadcasted_iota(jnp.int32, (tr, 1), 0) + tile_start
        per_ex = jnp.where(row < total_rows, per_ex, 0.0)

    # per-dataset partial sums via a tiny one-hot matmul on the otherwise-idle MXU
    partial = jax.lax.dot_general(
        onehot_ref[...], per_ex,
        dimension_numbers=(((1,), (0,)), ((), ())),
        preferred_element_type=jnp.float32)                     # [S_pad, 1]
    acc_ref[...] += partial

    @pl.when(i == pl.num_programs(1) - 1)
    def _finalize():
        out_ref[...] = acc_ref[...].reshape(out_ref.shape)


def _per_dataset_losses(logits, targets, *, use_lse=False, fast_exp=False,
                        max_tile_rows=None):
    """Run the Pallas kernel; returns per-dataset mean losses, shape [S]."""
    B, S, C = logits.shape
    assert targets.shape == (B, S)
    N = B * S
    itemsize = jnp.dtype(logits.dtype).itemsize

    # free reshapes: trailing dims untouched, no transpose
    x2 = logits.reshape(N, C)
    tgt2 = targets.astype(jnp.int32).reshape(N, 1)

    tr, num_splits, tps, vmem_limit = _plan_tiles(N, S, C, itemsize, max_tile_rows)
    num_tiles = -(-N // tr)
    need_mask = (num_splits * tps * tr) != N
    s_pad = max(8, _round_up(S, 8))

    # dataset one-hot: onehot[s, r] = 1 iff (local row r) % S == s.  Every tile starts
    # at a multiple of S, so the local row index alone determines the dataset.
    r = jnp.arange(tr, dtype=jnp.int32)
    s = jnp.arange(s_pad, dtype=jnp.int32)
    onehot = (r[None, :] % S == s[:, None]).astype(jnp.float32)   # [S_pad, TR]

    last_tile = num_tiles - 1

    def rows_map(p, i):
        # clamp padding tiles (uneven split) onto the last real tile; their rows are
        # >= N and get zeroed by the in-kernel row mask
        t = p * tps + i
        return (jnp.minimum(t, last_tile), 0)

    kernel = functools.partial(
        _loss_kernel, use_lse=use_lse, bf16_exp=fast_exp, total_rows=N,
        tile_rows=tr, tiles_per_split=tps, need_mask=need_mask)

    cost = pl.CostEstimate(
        flops=int(8 * N * C),
        transcendentals=int(N * C + 2 * N),
        bytes_accessed=int(N * C * itemsize + N * 4 + s_pad * tr * 4
                           + num_splits * s_pad * 4),
    )

    out = pl.pallas_call(
        kernel,
        out_shape=jax.ShapeDtypeStruct((num_splits, s_pad, 1), jnp.float32),
        grid_spec=pltpu.PrefetchScalarGridSpec(
            num_scalar_prefetch=0,
            grid=(num_splits, tps),
            in_specs=[
                pl.BlockSpec((tr, C), rows_map),                 # logits rows (native dtype)
                pl.BlockSpec((tr, 1), rows_map),                 # int32 targets
                pl.BlockSpec((s_pad, tr), lambda p, i: (0, 0)),  # resident dataset one-hot
            ],
            out_specs=pl.BlockSpec((1, s_pad, 1), lambda p, i: (p, 0, 0)),
            scratch_shapes=[pltpu.VMEM((s_pad, 1), jnp.float32)],
        ),
        compiler_params=pltpu.CompilerParams(
            dimension_semantics=("parallel", "arbitrary"),
            vmem_limit_bytes=vmem_limit,
        ),
        cost_estimate=cost,
    )(x2, tgt2, onehot)

    return jnp.sum(out[:, :S, 0], axis=0) / B


class PallasLoss:
    """JAX/Pallas port of the `Loss` base module forward semantics.

      logits [B, S, C], targets [B, S]  ->  (final_loss [1], per_dataset_losses [S])
    """

    def __init__(self, beta=0.5, num_datasets=1, dataset_dropout=None,
                 dataset_weights=None, worst_k_transfer_loss=None,
                 use_lse=False, fast_exp=False, **kwargs):
        _ = kwargs
        self._beta = float(beta)
        self._use_lse = bool(use_lse)
        self._fast_exp = bool(fast_exp)
        if dataset_dropout is not None and len(dataset_dropout) != num_datasets:
            raise ValueError("Invalid dataset_dropout!")
        self._dataset_dropout = dataset_dropout
        if worst_k_transfer_loss is not None and worst_k_transfer_loss >= num_datasets:
            raise ValueError("Invalid worst_k_transfer_loss!")
        self._worst_k_transfer_loss = worst_k_transfer_loss
        if dataset_weights is None:
            dataset_weights = [1.0] * num_datasets
        if len(dataset_weights) != num_datasets:
            raise ValueError("Invalid dataset_weights!")
        w = jnp.asarray(dataset_weights, dtype=jnp.float32)
        self.weights = w / jnp.sum(w)            # registered-buffer equivalent
        self._num_datasets = num_datasets
        # TODO(synk): beta / dataset_dropout / worst_k_transfer_loss are stored config
        # only; the abstract base forward does not define how they are applied.

    def __call__(self, logits, targets):
        B, S, C = logits.shape
        if S != self._num_datasets:
            raise ValueError("logits second dim must equal num_datasets")
        if targets.shape != (B, S):
            raise ValueError("targets must have shape [B, S]")
        per_ds = _per_dataset_losses(logits, targets, use_lse=self._use_lse,
                                     fast_exp=self._fast_exp)
        final = jnp.sum(self.weights * per_ds)[None]            # [1]
        return final, per_ds


def _reference(logits, targets, weights, use_lse=False):
    """Pure-JAX reference for correctness checking."""
    B, S, C = logits.shape
    logp = jax.nn.log_softmax(logits.astype(jnp.float32), axis=-1)       # [B,S,C]
    if use_lse:
        p = jnp.exp(logp)
        oh = jax.nn.one_hot(targets, C, dtype=jnp.float32)
        per_ex = jnp.sum((p - oh) ** 2, axis=-1)                         # [B,S]
    else:
        per_ex = -jnp.take_along_axis(logp, targets[..., None], axis=-1)[..., 0]
    per_ds = jnp.mean(per_ex, axis=0)                                    # [S]
    final = jnp.sum(weights * per_ds)[None]                              # [1]
    return final, per_ds


if __name__ == "__main__":
    key = jax.random.PRNGKey(0)

    # --- small single-tile case --------------------------------------------
    B, S, C = 8, 3, 32
    k1, k2 = jax.random.split(key)
    logits = jax.random.normal(k1, (B, S, C), dtype=jnp.float32)
    targets = jax.random.randint(k2, (B, S), 0, C, dtype=jnp.int32)

    loss_ce = PallasLoss(num_datasets=S, dataset_weights=[1.0, 2.0, 1.0])
    final, per_ds = loss_ce(logits, targets)
    jax.block_until_ready((final, per_ds))
    ref_final, ref_per = _reference(logits, targets, loss_ce.weights)
    assert final.shape == (1,) and per_ds.shape == (S,)
    assert jnp.allclose(final, ref_final, atol=1e-5, rtol=1e-5)
    assert jnp.allclose(per_ds, ref_per, atol=1e-5, rtol=1e-5)

    # least-square-error path
    loss_lse = PallasLoss(num_datasets=S, dataset_weights=[1.0, 2.0, 1.0],
                          use_lse=True)
    final_l, per_l = loss_lse(logits, targets)
    jax.block_until_ready((final_l, per_l))
    ref_final_l, ref_per_l = _reference(logits, targets, loss_lse.weights,
                                        use_lse=True)
    assert jnp.allclose(final_l, ref_final_l, atol=1e-5, rtol=1e-5)
    assert jnp.allclose(per_l, ref_per_l, atol=1e-5, rtol=1e-5)

    # bf16 logits: DMA'd as bf16, f32 math inside the kernel
    logits_bf16 = logits.astype(jnp.bfloat16)
    final_b, per_b = loss_ce(logits_bf16, targets)
    jax.block_until_ready((final_b, per_b))
    ref_final_b, ref_per_b = _reference(logits_bf16, targets, loss_ce.weights)
    assert jnp.allclose(final_b, ref_final_b, atol=1e-4, rtol=1e-4)
    assert jnp.allclose(per_b, ref_per_b, atol=1e-4, rtol=1e-4)

    # --- multi-tile / 2-split / partial-tile-mask path ----------------------
    B2 = 20                                      # N = 60 rows, forced 24-row tiles
    k3, k4 = jax.random.split(k2)
    logits2 = jax.random.normal(k3, (B2, S, C), dtype=jnp.float32)
    targets2 = jax.random.randint(k4, (B2, S), 0, C, dtype=jnp.int32)
    for lse in (False, True):
        per2 = _per_dataset_losses(logits2, targets2, use_lse=lse, max_tile_rows=24)
        jax.block_until_ready(per2)
        _, ref2 = _reference(logits2, targets2, loss_ce.weights, use_lse=lse)
        assert jnp.allclose(per2, ref2, atol=1e-5, rtol=1e-5)

    # --- optional bf16-exp fast path (only on chips with bf16 EUP: v6e/v7x) --
    if _supports_bf16_eup():
        loss_fast = PallasLoss(num_datasets=S, dataset_weights=[1.0, 2.0, 1.0],
                               fast_exp=True)
        final_f, per_f = loss_fast(logits_bf16, targets)
        jax.block_until_ready((final_f, per_f))
        assert jnp.allclose(per_f, ref_per_b, atol=5e-2, rtol=5e-2)

    print("KERNEL_OK")
</pallas_src>

<mosaic_0001>
module attributes {stable_mosaic.version = 11 : i64} {
  func.func @_loss_kernel(%arg0: i32, %arg1: i32, %arg2: memref<24x32xf32, #tpu.memory_space<vmem>>, %arg3: memref<24x1xi32, #tpu.memory_space<vmem>>, %arg4: memref<8x24xf32, #tpu.memory_space<vmem>>, %arg5: memref<1x8x1xf32, #tpu.memory_space<vmem>>, %arg6: memref<8x1xf32, #tpu.memory_space<vmem>>) attributes {dimension_semantics = [#tpu.dimension_semantics<parallel>, #tpu.dimension_semantics<arbitrary>], iteration_bounds = array<i64: 1, 1>, scalar_prefetch = 0 : i64, scratch_operands = 1 : i64, tpu.core_type = #tpu.core_type<tc>, window_params = [{transform_indices = @transform_0, window_bounds = array<i64: 24, 32>}, {transform_indices = @transform_1, window_bounds = array<i64: 24, 1>}, {pipeline_mode = #tpu.pipeline_mode<synchronous>, transform_indices = @transform_2, window_bounds = array<i64: 8, 24>}, {transform_indices = @transform_3, window_bounds = array<i64: 1, 8, 1>}]} {
    %c0_i32 = arith.constant 0 : i32
    %0 = arith.cmpi eq, %arg1, %c0_i32 : i32
    %1 = arith.extui %0 : i1 to i32
    %c0_i32_0 = arith.constant 0 : i32
    %2 = arith.cmpi ne, %1, %c0_i32_0 : i32
    scf.if %2 {
      %cst_16 = arith.constant 0.000000e+00 : f32
      %29 = vector.broadcast %cst_16 : f32 to vector<8x1xf32>
      %c0_17 = arith.constant 0 : index
      %c0_18 = arith.constant 0 : index
      %30 = vector.load %arg6[%c0_17, %c0_18] : memref<8x1xf32, #tpu.memory_space<vmem>>, vector<8x1xf32>
      tpu.vector_store %arg6[%c0_17, %c0_18], %29 {strides = array<i32>} : memref<8x1xf32, #tpu.memory_space<vmem>>, vector<8x1xf32>,
    } else {
    }
    %c0 = arith.constant 0 : index
    %c0_1 = arith.constant 0 : index
    %3 = vector.load %arg2[%c0, %c0_1] : memref<24x32xf32, #tpu.memory_space<vmem>>, vector<24x32xf32>
    %c0_2 = arith.constant 0 : index
    %c0_3 = arith.constant 0 : index
    %4 = vector.load %arg3[%c0_2, %c0_3] : memref<24x1xi32, #tpu.memory_space<vmem>>, vector<24x1xi32>
    %cst = arith.constant dense<0xFF800000> : vector<24xf32>
    %5 = vector.multi_reduction <maximumf>, %3, %cst [1] : vector<24x32xf32> to vector<24xf32>
    %6 = vector.shape_cast %5 : vector<24xf32> to vector<24x1xf32>
    %7 = vector.broadcast %6 : vector<24x1xf32> to vector<24x32xf32>
    %8 = arith.subf %3, %7 : vector<24x32xf32>
    %9 = tpu.iota {dimensions = array<i32: 1>} : vector<24x32xi32>
    %10 = vector.broadcast %4 : vector<24x1xi32> to vector<24x32xi32>
    %11 = arith.cmpi eq, %9, %10 : vector<24x32xi32>
    %12 = math.exp %8 : vector<24x32xf32>
    %cst_4 = arith.constant dense<0.000000e+00> : vector<24xf32>
    %13 = vector.multi_reduction <add>, %12, %cst_4 [1] : vector<24x32xf32> to vector<24xf32>
    %14 = vector.shape_cast %13 : vector<24xf32> to vector<24x1xf32>
    %cst_5 = arith.constant 0.000000e+00 : f32
    %15 = vector.broadcast %cst_5 : f32 to vector<24x32xf32>
    %16 = arith.select %11, %8, %15 : vector<24x32xi1>, vector<24x32xf32>
    %cst_6 = arith.constant dense<0.000000e+00> : vector<24xf32>
    %17 = vector.multi_reduction <add>, %16, %cst_6 [1] : vector<24x32xf32> to vector<24xf32>
    %18 = vector.shape_cast %17 : vector<24xf32> to vector<24x1xf32>
    %19 = math.log %14 : vector<24x1xf32>
    %20 = arith.subf %19, %18 : vector<24x1xf32>
    %c0_7 = arith.constant 0 : index
    %c0_8 = arith.constant 0 : index
    %21 = vector.load %arg4[%c0_7, %c0_8] : memref<8x24xf32, #tpu.memory_space<vmem>>, vector<8x24xf32>
    %cst_9 = arith.constant dense<0.000000e+00> : vector<8x1xf32>
    %22 = tpu.matmul %21, %20, %cst_9 {dimension_numbers = #tpu.dot_dimension_numbers<[1], [0], [0], [1], [0, 0, 1, 1], [], []>} : vector<8x24xf32>, vector<24x1xf32>, vector<8x1xf32> -> vector<8x1xf32>
    %c0_10 = arith.constant 0 : index
    %c0_11 = arith.constant 0 : index
    %23 = vector.load %arg6[%c0_10, %c0_11] : memref<8x1xf32, #tpu.memory_space<vmem>>, vector<8x1xf32>
    %24 = arith.addf %23, %22 : vector<8x1xf32>
    %c0_12 = arith.constant 0 : index
    %c0_13 = arith.constant 0 : index
    %25 = vector.load %arg6[%c0_12, %c0_13] : memref<8x1xf32, #tpu.memory_space<vmem>>, vector<8x1xf32>
    tpu.vector_store %arg6[%c0_12, %c0_13], %24 {strides = array<i32>} : memref<8x1xf32, #tpu.memory_space<vmem>>, vector<8x1xf32>,
    %c0_i32_14 = arith.constant 0 : i32
    %26 = arith.cmpi eq, %arg1, %c0_i32_14 : i32
    %27 = arith.extui %26 : i1 to i32
    %c0_i32_15 = arith.constant 0 : i32
    %28 = arith.cmpi ne, %27, %c0_i32_15 : i32
    scf.if %28 {
      %c0_16 = arith.constant 0 : index
      %c0_17 = arith.constant 0 : index
      %29 = vector.load %arg6[%c0_16, %c0_17] : memref<8x1xf32, #tpu.memory_space<vmem>>, vector<8x1xf32>
      %30 = vector.shape_cast %29 : vector<8x1xf32> to vector<1x8x1xf32>
      %c0_18 = arith.constant 0 : index
      %c0_19 = arith.constant 0 : index
      %c0_20 = arith.constant 0 : index
      %31 = vector.load %arg5[%c0_18, %c0_19, %c0_20] : memref<1x8x1xf32, #tpu.memory_space<vmem>>, vector<1x8x1xf32>
      tpu.vector_store %arg5[%c0_18, %c0_19, %c0_20], %30 {strides = array<i32>} : memref<1x8x1xf32, #tpu.memory_space<vmem>>, vector<1x8x1xf32>,
    } else {
    }
    return
  }
  func.func @transform_0(%arg0: i32, %arg1: i32) -> (i32, i32) {
    %c1_i32 = arith.constant 1 : i32
    %0 = arith.muli %arg0, %c1_i32 : i32
    %1 = arith.addi %0, %arg1 : i32
    %c0_i32 = arith.constant 0 : i32
    %2 = arith.minsi %1, %c0_i32 : i32
    %c0_i32_0 = arith.constant 0 : i32
    %c0_i32_1 = arith.constant 0 : i32
    return %2, %c0_i32_0 : i32, i32
  }
  func.func @transform_1(%arg0: i32, %arg1: i32) -> (i32, i32) {
    %c1_i32 = arith.constant 1 : i32
    %0 = arith.muli %arg0, %c1_i32 : i32
    %1 = arith.addi %0, %arg1 : i32
    %c0_i32 = arith.constant 0 : i32
    %2 = arith.minsi %1, %c0_i32 : i32
    %c0_i32_0 = arith.constant 0 : i32
    %c0_i32_1 = arith.constant 0 : i32
    return %2, %c0_i32_0 : i32, i32
  }
  func.func @transform_2(%arg0: i32, %arg1: i32) -> (i32, i32) {
    %c0_i32 = arith.constant 0 : i32
    %c0_i32_0 = arith.constant 0 : i32
    %c0_i32_1 = arith.constant 0 : i32
    return %c0_i32, %c0_i32_0 : i32, i32
  }
  func.func @transform_3(%arg0: i32, %arg1: i32) -> (i32, i32, i32) {
    %c0_i32 = arith.constant 0 : i32
    %c0_i32_0 = arith.constant 0 : i32
    %c0_i32_1 = arith.constant 0 : i32
    return %arg0, %c0_i32, %c0_i32_0 : i32, i32, i32
  }
}

</mosaic_0001>

<llo_original>
// kernel: tpu_custom_call.1
$region0: #{tpu_custom_call.1}
  #allocation0 [shape = 'u32[]', space=smem, size = 0x4, offset = 0x4, fixed_abs, tag = 'smem constant byte address 0x4 - core index']
  #allocation1 [shape = 'u32[72,128]{1,0:T(1,128)}', space=vmem, size = 0x9000, scoped, tag = 'internal scratch']
  #allocation2 [shape = 'f32[8,1]{1,0:T(8,128)}', space=vmem, size = 0x1000, scoped, tag = 'scratch operand']
  %s0 = inlined_call_operand.vmem [shape: f32[24,32], index: 0, kind: input, shape index: {}]
  %s1 = inlined_call_operand.vmem [shape: s32[24,1], index: 1, kind: input, shape index: {}]
  %s2 = inlined_call_operand.hbm [shape: f32[8,24], index: 2, kind: input, shape index: {}]
  %s3 = inlined_call_operand.vmem [shape: f32[1,8,1], index: 3, kind: output, shape index: {}]
  %s4 = sld [smem:[#allocation0]]
  $region34: #{tpu_custom_call.1} parent=0
    _
  %s6 = ssub.s32 1, %s4
  %s7 = scalar_select 0, %s6, %s4
  $region1: #{tpu_custom_call.1} parent=0
    #allocation3 [shape = 'u8[4096]{0}', space=vmem, size = 0x1000, scoped, tag = 'input window, operand 2, single buffered']
    #allocation4 [shape = 's32[1]{0}', space=sflag, size = 0x4, scoped, tag = 'scoped memory for tpu_custom_call.1']
    %8 = vsyncpa [#allocation4], 0
    // Predicated region
    $region2: #{tpu_custom_call.1} parent=1 // pred_check
      _
    $region3: #{tpu_custom_call.1} parent=1 // pred_check_branch
      %10 = sbr.rel (0) target = $region5
    $region4: #{tpu_custom_call.1} parent=1 // pred_region
      %s11 = sadd.s32 0, 0
      %p12 = scmp.lt.s32.totalorder %s11, 0
      %s13 = scalar_select %p12, %s11, 0
      %s14 = smul.u32 3, %s13
      %p15 = scmp.lt.s32.totalorder %s14, 2
      %s16 = scalar_select %p15, %s14, 2
      %s17 = smul.addr %s16, 8
      %s18 = scalar_lea.vmem %s0, %s17
      %s19 = sadd.s32 0, 0
      %p20 = scmp.lt.s32.totalorder %s19, 0
      %s21 = scalar_select %p20, %s19, 0
      %s22 = smul.u32 3, %s21
    $region5: #{tpu_custom_call.1} parent=1 // pred_fallthru
      _
    // Predicated region
    $region6: #{tpu_custom_call.1} parent=1 // pred_check
      _
    $region7: #{tpu_custom_call.1} parent=1 // pred_check_branch
      %24 = sbr.rel (0) target = $region9
    $region8: #{tpu_custom_call.1} parent=1 // pred_region
      %s25 = sadd.s32 0, 0
      %p26 = scmp.lt.s32.totalorder %s25, 0
      %s27 = scalar_select %p26, %s25, 0
      %s28 = smul.u32 3, %s27
      %p29 = scmp.lt.s32.totalorder %s28, 2
      %s30 = scalar_select %p29, %s28, 2
      %s31 = smul.addr %s30, 8
      %s32 = scalar_lea.vmem %s1, %s31
      %s33 = sadd.s32 0, 0
      %p34 = scmp.lt.s32.totalorder %s33, 0
      %s35 = scalar_select %p34, %s33, 0
      %s36 = smul.u32 3, %s35
    $region9: #{tpu_custom_call.1} parent=1 // pred_fallthru
      _
    // Predicated region
    $region10: #{tpu_custom_call.1} parent=1 // pred_check
      _
    $region11: #{tpu_custom_call.1} parent=1 // pred_check_branch
      %38 = sbr.rel (0) target = $region13
    $region12: #{tpu_custom_call.1} parent=1 // pred_region
      %40 = vsyncadd [#allocation4], 0
      %s42 = sshll.u32 %s2, 4
      %s43 = int_to_ptr.hbm [resolvable:$true] %s42
      %s44 = sshll.u32 [#allocation3], 4
      %s45 = int_to_ptr.vmem [resolvable:$true] %s44
      %47 = dma.hbm_to_vmem [thread:$0]  %s43, 128, %s45, [#allocation4]
    $region13: #{tpu_custom_call.1} parent=1 // pred_fallthru
      _
    // Predicated region
    $region14: #{tpu_custom_call.1} parent=1 // pred_check
      _
    $region15: #{tpu_custom_call.1} parent=1 // pred_check_branch
      %49 = sbr.rel (0) target = $region17
    $region16: #{tpu_custom_call.1} parent=1 // pred_region
      %51 = dma.done [#allocation4], 128
    $region17: #{tpu_custom_call.1} parent=1 // pred_fallthru
      _
    %s52 = sadd.s32 0, 0
    %p53 = scmp.lt.s32.totalorder %s52, 0
    %s54 = scalar_select %p53, %s52, 0
    %s55 = smul.u32 3, %s54
    %p56 = scmp.lt.s32.totalorder %s55, 2
    %s57 = scalar_select %p56, %s55, 2
    %s58 = smul.addr %s57, 8
    %s59 = scalar_lea.vmem %s0, %s58
    %s60 = sadd.s32 0, 0
    %p61 = scmp.lt.s32.totalorder %s60, 0
    %s62 = scalar_select %p61, %s60, 0
    %s63 = smul.u32 3, %s62
    %p64 = scmp.lt.s32.totalorder %s63, 2
    %s65 = scalar_select %p64, %s63, 2
    %s66 = smul.addr %s65, 8
    %s67 = scalar_lea.vmem %s1, %s66
    %s68 = sadd.s32 0, 0
    %p69 = scmp.lt.s32.totalorder %s68, 0
    %s70 = scalar_select %p69, %s68, 0
    %s71 = smul.u32 3, %s70
    %p72 = scmp.lt.s32.totalorder %s71, 2
    %s73 = scalar_select %p72, %s71, 2
    %s74 = smul.addr %s73, 8
    %s75 = scalar_lea.vmem %s0, %s74
    %s76 = sadd.s32 0, 0
    %p77 = scmp.lt.s32.totalorder %s76, 0
    %s78 = scalar_select %p77, %s76, 0
    %s79 = smul.u32 3, %s78
    %s80 = sadd.s32 0, 0
    %p81 = scmp.lt.s32.totalorder %s80, 0
    %s82 = scalar_select %p81, %s80, 0
    %s83 = smul.u32 3, %s82
    %p84 = scmp.lt.s32.totalorder %s83, 2
    %s85 = scalar_select %p84, %s83, 2
    %s86 = smul.addr %s85, 8
    %s87 = scalar_lea.vmem %s1, %s86
    %s88 = sadd.s32 0, 0
    %p89 = scmp.lt.s32.totalorder %s88, 0
    %s90 = scalar_select %p89, %s88, 0
    %s91 = smul.u32 3, %s90
    %p92 = scmp.eq.s32.totalorder 0, 0
    // Predicated region
    $region18: #{tpu_custom_call.1} parent=1 // pred_check
      %p93 = pneg %p92
    $region19: #{tpu_custom_call.1} parent=1 // pred_check_branch
      %95 = sbr.rel (%p93) target = $region21
    $region20: #{tpu_custom_call.1} parent=1 // pred_region
      %vm96 = vcmask 7168
      %97 = vst.msk [vmem:[#allocation2] sm:$0xff] %vm96, 0.0
    $region21: #{tpu_custom_call.1} parent=1 // pred_fallthru
      _
    %v98 = vld [vmem:[%s75] sm:$0xff]
    %v99 = vld [vmem:[%s75 + $0x8] sm:$0xff]
    %v100 = vld [vmem:[%s75 + $0x10] sm:$0xff]
    %v101 = vld [vmem:[%s87] sm:$0xff]
    %v102 = vld [vmem:[%s87 + $0x8] sm:$0xff]
    %v103 = vld [vmem:[%s87 + $0x10] sm:$0xff]
    %vm104 = vcmask 261120
    %v105 = vsel %vm104, %v98, -inf
    %106 = vmax.xlane.f32.xlu0 %v105
    %v107 = vpop.xlane.xlu0 %106
    %v108 = vsel %vm104, %v99, -inf
    %109 = vmax.xlane.f32.xlu0 %v108
    %v110 = vpop.xlane.xlu0 %109
    %v111 = vsel %vm104, %v100, -inf
    %112 = vmax.xlane.f32.xlu0 %v111
    %v113 = vpop.xlane.xlu0 %112
    %v114 = vsub.f32 %v98, %v107
    %v115 = vsub.f32 %v99, %v110
    %v116 = vsub.f32 %v100, %v113
    %v117 = vlaneseq
    %v118 = vand.u32 %v117, 127
    %119 = vset.pattern.permute.xlu0 0
    %120 = vperm.xlu0 %119, %v101
    %v121 = vpop.permute.xlu0 %120
    %122 = vset.pattern.permute.xlu0 0
    %123 = vperm.xlu0 %122, %v102
    %v124 = vpop.permute.xlu0 %123
    %125 = vset.pattern.permute.xlu0 0
    %126 = vperm.xlu0 %125, %v103
    %v127 = vpop.permute.xlu0 %126
    %vm128 = vcmp.eq.s32.totalorder %v118, %v121
    %vm129 = vcmp.eq.s32.totalorder %v118, %v124
    %vm130 = vcmp.eq.s32.totalorder %v118, %v127
    %v131 = vmul.f32 %v114, 1.442695
    %v132 = vpow.pop %v131
    %v133 = vmul.f32 %v115, 1.442695
    %v134 = vpow.pop %v133
    %v135 = vmul.f32 %v116, 1.442695
    %v136 = vpow.pop %v135
    %v137 = vsel %vm104, %v132, 0.0
    %138 = vadd.xlane.f32.xlu0 %v137
    %v139 = vpop.xlane.xlu0 %138
    %v140 = vsel %vm104, %v134, 0.0
    %141 = vadd.xlane.f32.xlu0 %v140
    %v142 = vpop.xlane.xlu0 %141
    %v143 = vsel %vm104, %v136, 0.0
    %144 = vadd.xlane.f32.xlu0 %v143
    %v145 = vpop.xlane.xlu0 %144
    %v146 = vsel %vm128, %v114, 0.0
    %v147 = vsel %vm129, %v115, 0.0
    %v148 = vsel %vm130, %v116, 0.0
    %v149 = vsel %vm104, %v146, 0.0
    %150 = vadd.xlane.f32.xlu0 %v149
    %v151 = vpop.xlane.xlu0 %150
    %v152 = vsel %vm104, %v147, 0.0
    %153 = vadd.xlane.f32.xlu0 %v152
    %v154 = vpop.xlane.xlu0 %153
    %v155 = vsel %vm104, %v148, 0.0
    %156 = vadd.xlane.f32.xlu0 %v155
    %v157 = vpop.xlane.xlu0 %156
    %v158 = vlog2.pop %v139
    %v159 = vmul.f32 %v158, 0.6931472
    %v160 = vlog2.pop %v142
    %v161 = vmul.f32 %v160, 0.6931472
    %v162 = vlog2.pop %v145
    %v163 = vmul.f32 %v162, 0.6931472
    %v164 = vsub.f32 %v159, %v151
    %v165 = vsub.f32 %v161, %v154
    %v166 = vsub.f32 %v163, %v157
    %v167 = vld [vmem:[#allocation3] sm:$0xff]
    %vm168 = vcmask 195584
    %v170 = vsel %vm168, %v167, 0
    %172 = vmatpush.msra.mxu0 0.0
    %173 = vmatpush.msra.mxu0 0.0
    %174 = vmatpush.msra.mxu0 0.0
    %175 = vmatpush.msra.mxu0 0.0
    %176 = vmatpush.msra.mxu0 0.0
    %177 = vmatpush.msra.mxu0 0.0
    %178 = vmatpush.msra.mxu0 0.0
    %179 = vmatpush.msra.mxu0 0.0
    %180 = vmatpush.msra.mxu0 0.0
    %181 = vmatpush.msra.mxu0 0.0
    %182 = vmatpush.msra.mxu0 0.0
    %183 = vmatpush.msra.mxu0 0.0
    %184 = vmatpush.msra.mxu0 0.0
    %185 = vmatpush.msra.mxu0 %v166
    %186 = vmatpush.msra.mxu0 %v165
    %187 = vmatpush.msra.mxu0 %v164
    %188 = vmatmul.f32.gmra.mxu0 %v170
    %v189 = vpop.f32.mrf.mxu0
    %v190 = vadd.f32 0.0, %v189
    %191 = vdwg.mxu0
    %v192 = vld [vmem:[#allocation2] sm:$0xff]
    %v193 = vadd.f32 %v192, %v190
    %vm194 = vcmask 7168
    %195 = vst.msk [vmem:[#allocation2] sm:$0xff] %vm194, %v193
    // Predicated region
    $region22: #{tpu_custom_call.1} parent=1 // pred_check
      %p196 = pneg %p92
    $region23: #{tpu_custom_call.1} parent=1 // pred_check_branch
      %198 = sbr.rel (%p196) target = $region25
    $region24: #{tpu_custom_call.1} parent=1 // pred_region
      %v199 = vld [vmem:[#allocation2] sm:$0xff]
      %200 = vst.msk [vmem:[%s3] sm:$0xff] %vm194, %v199
    $region25: #{tpu_custom_call.1} parent=1 // pred_fallthru
      _
    // Predicated region
    $region26: #{tpu_custom_call.1} parent=1 // pred_check
      _
    $region27: #{tpu_custom_call.1} parent=1 // pred_check_branch
      %202 = sbr.rel (0) target = $region29
    $region28: #{tpu_custom_call.1} parent=1 // pred_region
      _
    $region29: #{tpu_custom_call.1} parent=1 // pred_fallthru
      _
    // Predicated region
    $region30: #{tpu_custom_call.1} parent=1 // pred_check
      _
    $region31: #{tpu_custom_call.1} parent=1 // pred_check_branch
      %204 = sbr.rel (0) target = $region33
    $region32: #{tpu_custom_call.1} parent=1 // pred_region
      _
    $region33: #{tpu_custom_call.1} parent=1 // pred_fallthru
      _
    %205 = vsyncpa [#allocation4], 1

</llo_original>
